<compile_context>
chip_gen: v6e
topology: v6e:2x2x1
jax: 0.10.0
libtpu: 0.0.40
codegen_flags: <defaults>
</compile_context>

<pallas_src>
import functools

import jax
import jax.numpy as jnp
from jax.experimental import pallas as pl
from jax.experimental.pallas import tpu as pltpu

K_PAD = 128  # padded contraction dim (multiple of 128 -> full MXU lanes on v5e/v6e/v7x)
M_PAD = 128  # padded output dim      (lane-dense, unmasked stores)


def _round_up(v: int, m: int) -> int:
    return ((v + m - 1) // m) * m


def _dict_dense_kernel(choice_ref, x_ref, w_ref, o_ref):
    # choice_ref: SMEM (1,) int32   -- already consumed by the weight index_map
    # x_ref:      VMEM (TN, K_PAD)
    # w_ref:      VMEM (1, K_PAD, M_PAD)  (the selected choice's padded weight)
    # o_ref:      VMEM (TN, M_PAD)
    del choice_ref
    o_ref[...] = jnp.dot(
        x_ref[...], w_ref[0], preferred_element_type=jnp.float32
    ).astype(o_ref.dtype)


@jax.jit
def _padded_dict_dense(x, w_packed, choice_idx):
    """Computes (padded) x @ w_packed[choice_idx] with a single Pallas kernel.

    Returns an (N_pad, M_PAD) array; the caller slices out the valid (n, m) block.
    """
    n, k = x.shape
    _, k_pad, m_pad = w_packed.shape
    assert k <= k_pad, f"in_features {k} exceeds padded K {k_pad}"

    # Row tile: sublane-aligned for tiny n, 512 rows for large batched n.
    tn = min(512, _round_up(n, 8))
    n_pad = _round_up(n, tn)

    # Zero-pad activations to a lane-dense (N_pad, K_PAD) tile (zeros do not change the mm).
    x_p = jnp.pad(x, ((0, n_pad - n), (0, k_pad - k)))

    grid = (n_pad // tn,)
    out_p = pl.pallas_call(
        _dict_dense_kernel,
        out_shape=jax.ShapeDtypeStruct((n_pad, m_pad), x.dtype),
        grid_spec=pltpu.PrefetchScalarGridSpec(
            num_scalar_prefetch=1,  # choice_idx lands in SMEM, feeds the index_maps
            grid=grid,
            in_specs=[
                # x: one row-tile per grid step.
                pl.BlockSpec((tn, k_pad), lambda i, c: (i, 0)),
                # w: choice selected at runtime; constant across the grid -> DMA'd once,
                # stays VMEM-resident for every row-tile.
                pl.BlockSpec((1, k_pad, m_pad), lambda i, c: (c[0], 0, 0)),
            ],
            out_specs=pl.BlockSpec((tn, m_pad), lambda i, c: (i, 0)),
        ),
        compiler_params=pltpu.CompilerParams(
            dimension_semantics=("parallel",),  # shard N across TCs on v7x; no-op v5e/v6e
        ),
    )(choice_idx, x_p, w_packed)
    return out_p


class MyDictDense:
    """JAX/Pallas port of the PyTorch MyDictDense module."""

    _CHOICES = ("linear1", "linear2", "linear3")
    _SHAPES = {"linear1": (4, 4), "linear2": (4, 1), "linear3": (4, 2)}

    def __init__(self, key):
        keys = jax.random.split(key, len(self._CHOICES))
        # torch.randn -> standard normal, deterministic via PRNGKey
        self.params = {
            name: jax.random.normal(k, self._SHAPES[name], dtype=jnp.float32)
            for name, k in zip(self._CHOICES, keys)
        }
        # Pack all choices into one zero-padded (num_choices, 128, 128) tensor so a
        # single compiled kernel serves every choice (selected by scalar prefetch).
        packed = jnp.zeros((len(self._CHOICES), K_PAD, M_PAD), jnp.float32)
        for i, name in enumerate(self._CHOICES):
            w = self.params[name]
            packed = packed.at[i, : w.shape[0], : w.shape[1]].set(w)
        self.w_packed = packed
        self._choice_to_idx = {name: i for i, name in enumerate(self._CHOICES)}

    def __call__(self, x, choice="linear1"):
        n, _ = x.shape
        m = self._SHAPES[choice][1]
        choice_idx = jnp.array([self._choice_to_idx[choice]], dtype=jnp.int32)
        out_p = _padded_dict_dense(x, self.w_packed, choice_idx)
        # Slice the valid block back out of the lane-dense padded output.
        return out_p[:n, :m]


if __name__ == "__main__":
    key = jax.random.PRNGKey(0)
    net = MyDictDense(key)

    # x = torch.ones(1, 4)  (spec shape)
    x = jnp.ones((1, 4), dtype=jnp.float32)

    outs = {}
    for choice in ("linear1", "linear2", "linear3"):
        outs[choice] = net(x, choice=choice)
    jax.block_until_ready(outs)

    # Reference check against plain JAX matmul.
    for choice, w in net.params.items():
        ref = x @ w
        assert outs[choice].shape == ref.shape, (outs[choice].shape, ref.shape)
        assert jnp.allclose(outs[choice], ref, atol=1e-5, rtol=1e-5), choice

    # Also exercise the batched / gridded path with a small batch.
    kx = jax.random.PRNGKey(1)
    xb = jax.random.normal(kx, (16, 4), dtype=jnp.float32)
    for choice, w in net.params.items():
        out_b = net(xb, choice=choice)
        ref_b = xb @ w
        jax.block_until_ready(out_b)
        assert out_b.shape == ref_b.shape
        assert jnp.allclose(out_b, ref_b, atol=1e-5, rtol=1e-5), choice

    print("KERNEL_OK")
</pallas_src>

<mosaic_0001>
module attributes {stable_mosaic.version = 11 : i64} {
  func.func @_dict_dense_kernel(%arg0: i32, %arg1: memref<1xi32, #tpu.memory_space<smem>>, %arg2: memref<8x128xf32, #tpu.memory_space<vmem>>, %arg3: memref<1x128x128xf32, #tpu.memory_space<vmem>>, %arg4: memref<8x128xf32, #tpu.memory_space<vmem>>) attributes {dimension_semantics = [#tpu.dimension_semantics<parallel>], iteration_bounds = array<i64: 1>, scalar_prefetch = 1 : i64, scratch_operands = 0 : i64, tpu.core_type = #tpu.core_type<tc>, window_params = [{transform_indices = @transform_0, window_bounds = array<i64: 8, 128>}, {transform_indices = @transform_1, window_bounds = array<i64: 1, 128, 128>}, {transform_indices = @transform_2, window_bounds = array<i64: 8, 128>}]} {
    %c0 = arith.constant 0 : index
    %c0_0 = arith.constant 0 : index
    %0 = vector.load %arg2[%c0, %c0_0] : memref<8x128xf32, #tpu.memory_space<vmem>>, vector<8x128xf32>
    %c0_1 = arith.constant 0 : index
    %c0_2 = arith.constant 0 : index
    %c0_3 = arith.constant 0 : index
    %1 = vector.load %arg3[%c0_1, %c0_2, %c0_3] : memref<1x128x128xf32, #tpu.memory_space<vmem>>, vector<1x128x128xf32>
    %2 = vector.shape_cast %1 : vector<1x128x128xf32> to vector<128x128xf32>
    %cst = arith.constant dense<0.000000e+00> : vector<8x128xf32>
    %3 = tpu.matmul %0, %2, %cst {dimension_numbers = #tpu.dot_dimension_numbers<[1], [0], [0], [1], [0, 0, 1, 1], [], []>} : vector<8x128xf32>, vector<128x128xf32>, vector<8x128xf32> -> vector<8x128xf32>
    %c0_4 = arith.constant 0 : index
    %c0_5 = arith.constant 0 : index
    %4 = vector.load %arg4[%c0_4, %c0_5] : memref<8x128xf32, #tpu.memory_space<vmem>>, vector<8x128xf32>
    tpu.vector_store %arg4[%c0_4, %c0_5], %3 {strides = array<i32>} : memref<8x128xf32, #tpu.memory_space<vmem>>, vector<8x128xf32>,
    return
  }
  func.func @transform_0(%arg0: i32, %arg1: memref<1xi32, #tpu.memory_space<smem>>) -> (i32, i32) {
    %c0_i32 = arith.constant 0 : i32
    %c0_i32_0 = arith.constant 0 : i32
    return %arg0, %c0_i32 : i32, i32
  }
  func.func @transform_1(%arg0: i32, %arg1: memref<1xi32, #tpu.memory_space<smem>>) -> (i32, i32, i32) {
    %c0 = arith.constant 0 : index
    %0 = memref.load %arg1[%c0] : memref<1xi32, #tpu.memory_space<smem>>
    %c0_i32 = arith.constant 0 : i32
    %c0_i32_0 = arith.constant 0 : i32
    %c0_i32_1 = arith.constant 0 : i32
    return %0, %c0_i32, %c0_i32_0 : i32, i32, i32
  }
  func.func @transform_2(%arg0: i32, %arg1: memref<1xi32, #tpu.memory_space<smem>>) -> (i32, i32) {
    %c0_i32 = arith.constant 0 : i32
    %c0_i32_0 = arith.constant 0 : i32
    return %arg0, %c0_i32 : i32, i32
  }
}

</mosaic_0001>

<llo_original>
// kernel: _padded_dict_dense.1
$region0: #{_padded_dict_dense.1}
  #allocation0 [shape = 'u32[]', space=smem, size = 0x4, offset = 0x4, fixed_abs, tag = 'smem constant byte address 0x4 - core index']
  #allocation1 [shape = 'u32[144,128]{1,0:T(1,128)}', space=vmem, size = 0x12000, scoped, tag = 'internal scratch']
  #allocation2 [shape = 's32[1]{0}', space=sflag, size = 0x4, scoped, tag = 'scoped memory for _padded_dict_dense.1']
  #allocation3 [shape = 's32[1]{0:T(128)S(6)}', space=smem, size = 0x200, scoped, tag = 'prefetched SMEM operand 0']
  %s0 = inlined_call_operand.<no memory space> [shape: s32[1], index: 0, kind: input, shape index: {}]
  %s1 = inlined_call_operand.vmem [shape: f32[8,128], index: 1, kind: input, shape index: {}]
  %s2 = inlined_call_operand.hbm [shape: f32[3,128,128], index: 2, kind: input, shape index: {}]
  %s3 = inlined_call_operand.hbm [shape: f32[8,128], index: 3, kind: output, shape index: {}]
  %s4 = sld [smem:[#allocation0]]
  $region22: #{_padded_dict_dense.1} parent=0
    _
  %s6 = ssub.s32 1, %s4
  %s7 = scalar_select 0, %s6, %s4
  %8 = sst [smem:[#allocation3]] %s0
  $region1: #{_padded_dict_dense.1} parent=0
    #allocation4 [shape = 'u8[65536]{0}', space=vmem, size = 0x10000, scoped, tag = 'input window, operand 2, single buffered']
    #allocation5 [shape = 's32[1]{0}', space=sflag, size = 0x4, scoped, tag = 'scoped memory for _padded_dict_dense.1']
    #allocation6 [shape = 's32[1]{0}', space=sflag, size = 0x4, scoped, tag = 'scoped memory for _padded_dict_dense.1']
    #allocation7 [shape = 'u8[4096]{0}', space=vmem, size = 0x1000, scoped, tag = 'output window, operand 0, single buffered']
    %9 = vsyncpa [#allocation5], 0
    %10 = vsyncpa [#allocation6], 0
    // Predicated region
    $region2: #{_padded_dict_dense.1} parent=1 // pred_check
      _
    $region3: #{_padded_dict_dense.1} parent=1 // pred_check_branch
      %12 = sbr.rel (0) target = $region5
    $region4: #{_padded_dict_dense.1} parent=1 // pred_region
      _
    $region5: #{_padded_dict_dense.1} parent=1 // pred_fallthru
      _
    // Predicated region
    $region6: #{_padded_dict_dense.1} parent=1 // pred_check
      _
    $region7: #{_padded_dict_dense.1} parent=1 // pred_check_branch
      %14 = sbr.rel (0) target = $region9
    $region8: #{_padded_dict_dense.1} parent=1 // pred_region
      %s15 = sld [smem:[#allocation3]]
      %s17 = ssub.s32 2048, 2048
      %18 = vsyncadd [#allocation5], %s17
      %s19 = smul.addr %s15, 16
      %s20 = smul.addr %s19, 128
      %s21 = scalar_lea.hbm %s2, %s20
      %s22 = sshll.u32 [#allocation4], 4
      %s23 = int_to_ptr.vmem [resolvable:$true] %s22
      %28 = dma.hbm_to_vmem [thread:$0]  %s21, 2048, %s23, [#allocation5], 128, 128, 8
    $region9: #{_padded_dict_dense.1} parent=1 // pred_fallthru
      _
    // Predicated region
    $region10: #{_padded_dict_dense.1} parent=1 // pred_check
      _
    $region11: #{_padded_dict_dense.1} parent=1 // pred_check_branch
      %30 = sbr.rel (0) target = $region13
    $region12: #{_padded_dict_dense.1} parent=1 // pred_region
      %31 = dma.done [#allocation5], 2048
    $region13: #{_padded_dict_dense.1} parent=1 // pred_fallthru
      _
    %s32 = sld [smem:[#allocation3]]
    %v33 = vld [vmem:[%s1] sm:$0xff]
    %v34 = vld [vmem:[#allocation4] sm:$0xff]
    %v35 = vld [vmem:[#allocation4 + $0x8] sm:$0xff]
    %v36 = vld [vmem:[#allocation4 + $0x10] sm:$0xff]
    %v37 = vld [vmem:[#allocation4 + $0x18] sm:$0xff]
    %v38 = vld [vmem:[#allocation4 + $0x20] sm:$0xff]
    %v39 = vld [vmem:[#allocation4 + $0x28] sm:$0xff]
    %v40 = vld [vmem:[#allocation4 + $0x30] sm:$0xff]
    %v41 = vld [vmem:[#allocation4 + $0x38] sm:$0xff]
    %v42 = vld [vmem:[#allocation4 + $0x40] sm:$0xff]
    %v43 = vld [vmem:[#allocation4 + $0x48] sm:$0xff]
    %v44 = vld [vmem:[#allocation4 + $0x50] sm:$0xff]
    %v45 = vld [vmem:[#allocation4 + $0x58] sm:$0xff]
    %v46 = vld [vmem:[#allocation4 + $0x60] sm:$0xff]
    %v47 = vld [vmem:[#allocation4 + $0x68] sm:$0xff]
    %v48 = vld [vmem:[#allocation4 + $0x70] sm:$0xff]
    %v49 = vld [vmem:[#allocation4 + $0x78] sm:$0xff]
    %50 = vmatprep.subr.mxu0 0.0
    %51 = vmatpush1.msra.mxu0 %v49
    %52 = vmatprep.subr.mxu0 0.0
    %53 = vmatpush1.msra.mxu0 %v48
    %54 = vmatprep.subr.mxu0 0.0
    %55 = vmatpush1.msra.mxu0 %v47
    %56 = vmatprep.subr.mxu0 0.0
    %57 = vmatpush1.msra.mxu0 %v46
    %58 = vmatprep.subr.mxu0 0.0
    %59 = vmatpush1.msra.mxu0 %v45
    %60 = vmatprep.subr.mxu0 0.0
    %61 = vmatpush1.msra.mxu0 %v44
    %62 = vmatprep.subr.mxu0 0.0
    %63 = vmatpush1.msra.mxu0 %v43
    %64 = vmatprep.subr.mxu0 0.0
    %65 = vmatpush1.msra.mxu0 %v42
    %66 = vmatprep.subr.mxu0 0.0
    %67 = vmatpush1.msra.mxu0 %v41
    %68 = vmatprep.subr.mxu0 0.0
    %69 = vmatpush1.msra.mxu0 %v40
    %70 = vmatprep.subr.mxu0 0.0
    %71 = vmatpush1.msra.mxu0 %v39
    %72 = vmatprep.subr.mxu0 0.0
    %73 = vmatpush1.msra.mxu0 %v38
    %74 = vmatprep.subr.mxu0 0.0
    %75 = vmatpush1.msra.mxu0 %v37
    %76 = vmatprep.subr.mxu0 0.0
    %77 = vmatpush1.msra.mxu0 %v36
    %78 = vmatprep.subr.mxu0 0.0
    %79 = vmatpush1.msra.mxu0 %v35
    %80 = vmatprep.subr.mxu0 0.0
    %81 = vmatpush1.msra.mxu0 %v34
    %82 = vmatprep.subr.mxu0 0.0
    %83 = vmatpush2.msra.mxu0 0.0
    %84 = vmatprep.subr.mxu0 0.0
    %85 = vmatpush2.msra.mxu0 0.0
    %86 = vmatprep.subr.mxu0 0.0
    %87 = vmatpush2.msra.mxu0 0.0
    %88 = vmatprep.subr.mxu0 0.0
    %89 = vmatpush2.msra.mxu0 0.0
    %90 = vmatprep.subr.mxu0 0.0
    %91 = vmatpush2.msra.mxu0 0.0
    %92 = vmatprep.subr.mxu0 0.0
    %93 = vmatpush2.msra.mxu0 0.0
    %94 = vmatprep.subr.mxu0 0.0
    %95 = vmatpush2.msra.mxu0 0.0
    %96 = vmatprep.subr.mxu0 0.0
    %97 = vmatpush2.msra.mxu0 0.0
    %98 = vmatprep.subr.mxu0 0.0
    %99 = vmatpush2.msra.mxu0 0.0
    %100 = vmatprep.subr.mxu0 0.0
    %101 = vmatpush2.msra.mxu0 0.0
    %102 = vmatprep.subr.mxu0 0.0
    %103 = vmatpush2.msra.mxu0 0.0
    %104 = vmatprep.subr.mxu0 0.0
    %105 = vmatpush2.msra.mxu0 0.0
    %106 = vmatprep.subr.mxu0 0.0
    %107 = vmatpush2.msra.mxu0 0.0
    %108 = vmatprep.subr.mxu0 0.0
    %109 = vmatpush2.msra.mxu0 0.0
    %110 = vmatprep.subr.mxu0 0.0
    %111 = vmatpush2.msra.mxu0 0.0
    %112 = vmatprep.subr.mxu0 0.0
    %113 = vmatpush2.msra.mxu0 0.0
    %114 = vmatprep.mubr.f32.mxu0 0.0
    %115 = vmatmul.mubr.f32.gmra.mxu0 %v33
    %v116 = vpop.f32.mrf.mxu0
    %v117 = vadd.f32 0.0, %v116
    %v118 = vpop.f32.mrf.mxu0
    %119 = vdwg.mxu0
    %120 = vst [vmem:[#allocation7] sm:$0xff] %v117
    // Predicated region
    $region14: #{_padded_dict_dense.1} parent=1 // pred_check
      _
    $region15: #{_padded_dict_dense.1} parent=1 // pred_check_branch
      %122 = sbr.rel (0) target = $region17
    $region16: #{_padded_dict_dense.1} parent=1 // pred_region
      %s124 = ssub.s32 128, 128
      %125 = vsyncadd [#allocation6], %s124
      %s127 = sshll.u32 [#allocation7], 4
      %s128 = int_to_ptr.vmem [resolvable:$true] %s127
      %130 = dma.vmem_to_hbm [thread:$0]  %s128, 128, %s3, [#allocation6]
    $region17: #{_padded_dict_dense.1} parent=1 // pred_fallthru
      _
    // Predicated region
    $region18: #{_padded_dict_dense.1} parent=1 // pred_check
      _
    $region19: #{_padded_dict_dense.1} parent=1 // pred_check_branch
      %132 = sbr.rel (0) target = $region21
    $region20: #{_padded_dict_dense.1} parent=1 // pred_region
      %133 = dma.done [#allocation6], 128
    $region21: #{_padded_dict_dense.1} parent=1 // pred_fallthru
      _
    %134 = vsyncpa [#allocation5], 1
    %135 = vsyncpa [#allocation6], 1

</llo_original>
